<compile_context>
chip_gen: v6e
topology: v6e:2x2x1
jax: 0.10.0
libtpu: 0.0.40
codegen_flags: <defaults>
</compile_context>

<pallas_src>
import functools

import jax
import jax.numpy as jnp
import numpy as np
from jax.experimental import pallas as pl
from jax.experimental.pallas import tpu as pltpu


# ---------------------------------------------------------------------------
# Kernel 1: K / V projection (the 1x1 key/value convs).
# ---------------------------------------------------------------------------
def kv_proj_kernel(x_ref, wk_ref, bk_ref, wv_ref, bv_ref, kt_ref, v_ref):
    x = x_ref[0]                                                    # (TN, C) f32
    # kT[c8, n] = sum_c Wk[c, c8] * x[n, c]  -> (C8, TN): lane-dense along N,
    # produced directly by dot_general (no XLU transpose, no (N, C8) detour).
    kt = jax.lax.dot_general(
        wk_ref[...], x, dimension_numbers=(((0,), (1,)), ((), ())),
        preferred_element_type=jnp.float32)
    kt_ref[0] = (kt + bk_ref[...]).astype(kt_ref.dtype)             # + bk (C8,1)
    v = jnp.dot(x, wv_ref[...], preferred_element_type=jnp.float32) + bv_ref[...]
    v_ref[0] = v.astype(v_ref.dtype)


# ---------------------------------------------------------------------------
# Kernel 2: attention with flash-style online softmax over KV chunks.
# ---------------------------------------------------------------------------
def pam_attn_kernel(x_q_ref, kt_ref, v_ref, wq_ref, bq_ref, gamma_ref, o_ref,
                    m_ref, l_ref, acc_ref, *,
                    attn_dtype, exp_dtype, tkv, num_kv):
    x_q = x_q_ref[0]                                                # (TQ, C) f32
    q = (jnp.dot(x_q, wq_ref[...], preferred_element_type=jnp.float32)
         + bq_ref[...]).astype(attn_dtype)                          # (TQ, C8)

    # Online-softmax running state in VMEM scratch (re-initialized every tile,
    # so both grid axes can be "parallel").
    m_ref[...] = jnp.full(m_ref.shape, -jnp.inf, dtype=m_ref.dtype)
    l_ref[...] = jnp.zeros(l_ref.shape, dtype=l_ref.dtype)
    acc_ref[...] = jnp.zeros(acc_ref.shape, dtype=acc_ref.dtype)

    @pl.loop(0, num_kv)
    def _(kv):
        off = pl.multiple_of(kv * tkv, tkv)
        kt_c = kt_ref[0, :, pl.ds(off, tkv)]                        # (C8, TKV)
        v_c = v_ref[0, pl.ds(off, tkv), :]                          # (TKV, C)
        e = jnp.dot(q, kt_c, preferred_element_type=jnp.float32)    # (TQ, TKV) f32
        m_prev = m_ref[...]
        m_new = jnp.maximum(m_prev, jnp.max(e, axis=-1, keepdims=True))
        alpha = jnp.exp(m_prev - m_new)                             # (TQ, 1) f32
        # exp in bf16 on v6e/v7x (EUP relief); f32 accumulation of the row sum.
        p = jnp.exp((e - m_new).astype(exp_dtype))                  # (TQ, TKV)
        l_ref[...] = alpha * l_ref[...] + jnp.sum(
            p, axis=-1, keepdims=True, dtype=jnp.float32)
        acc_ref[...] = alpha * acc_ref[...] + jnp.dot(
            p.astype(attn_dtype), v_c, preferred_element_type=jnp.float32)
        m_ref[...] = m_new

    # Deferred normalization; exact reciprocal (only (TQ,1) values -> free).
    out = acc_ref[...] * pl.reciprocal(l_ref[...], approx=False)
    gamma = gamma_ref[0, 0]                                         # SMEM scalar
    o_ref[0] = (gamma * out + x_q).astype(o_ref.dtype)


# ---------------------------------------------------------------------------
# Generation-aware sizing helpers.
# ---------------------------------------------------------------------------
def _vmem_capacity_bytes():
    try:
        info = pltpu.get_tpu_info()
        for name in ("vmem_capacity_bytes", "vmem_capacity", "vmem_bytes"):
            cap = getattr(info, name, None)
            if cap:
                return int(cap)
    except Exception:
        pass
    return 64 * 1024 * 1024        # assume the most constrained part (v7x)


def _has_bf16_eup():
    # bf16 VPU/EUP exists on v6e (Trillium) and v7x, not on v5e and earlier.
    try:
        kind = jax.devices()[0].device_kind.lower()
    except Exception:
        return False
    return ("v6" in kind) or ("v7" in kind) or ("trillium" in kind)


def _divisor_tile(n, candidates):
    for t in candidates:
        if n % t == 0:
            return t
    return n


def _attn_vmem_estimate(n, c, c8, tq, tkv, ab):
    io = 2 * 2 * tq * c * 4                      # x_q + out tiles, double-buffered
    kv = 2 * (c8 + c) * n * ab                   # resident kT + v (double-buffered)
    wts = 2 * (c * c8 + c8) * 4
    scratch = 2 * tq * 4 + tq * c * 4            # m, l, acc
    tmp = 3 * tq * tkv * 4 + tq * c8 * 4 + 2 * tq * c * 4
    return io + kv + wts + scratch + tmp


def _pick_attn_tiles(n, c, c8, ab, budget):
    tkv = _divisor_tile(n, (2048, 1024, 512, 256, 128))
    tq_cands = [t for t in (512, 256, 128, 64, 32, 16, 8) if n % t == 0] or [n]
    for tq in tq_cands:
        if _attn_vmem_estimate(n, c, c8, tq, tkv, ab) <= budget:
            return tq, tkv
    return tq_cands[-1], tkv


# ---------------------------------------------------------------------------
# Forward wrapper.
# ---------------------------------------------------------------------------
def pam_forward(x_nchw, wq, bq, wk, bk, wv, bv, gamma, *,
                use_bf16_matmul=True, bf16_exp=None):
    """x_nchw: (B, C, H, W) f32; conv weights in (C_in, C_out) layout."""
    B, C, H, W = x_nchw.shape
    N = H * W
    C8 = wq.shape[1]

    attn_dtype = jnp.bfloat16 if use_bf16_matmul else jnp.float32
    ab = 2 if use_bf16_matmul else 4
    if bf16_exp is None:
        bf16_exp = use_bf16_matmul and _has_bf16_eup()
    exp_dtype = jnp.bfloat16 if (bf16_exp and use_bf16_matmul) else jnp.float32

    cap = _vmem_capacity_bytes()
    budget = int(0.65 * cap)
    vmem_limit = int(0.75 * cap)

    TQ, TKV = _pick_attn_tiles(N, C, C8, ab, budget)
    TN = TKV                      # projection row tile (same divisibility rules)
    NT, NPT, NUM_KV = N // TQ, N // TN, N // TKV

    # NCHW -> (B, N, C)
    x_bnc = jnp.transpose(x_nchw.reshape(B, C, N), (0, 2, 1))

    bq2 = bq.reshape(1, C8)
    bk2 = bk.reshape(C8, 1)       # column bias for the (C8, N) kT layout
    bv2 = bv.reshape(1, C)
    gamma2 = gamma.reshape(1, 1).astype(jnp.float32)

    # ---------------- K / V projection call ----------------
    proj_flops = 2 * B * N * C * (C8 + C)
    proj_bytes = 4 * (B * N * C + C * C8 + C8 + C * C + C) + ab * B * N * (C8 + C)

    kT, v = pl.pallas_call(
        kv_proj_kernel,
        out_shape=(jax.ShapeDtypeStruct((B, C8, N), attn_dtype),
                   jax.ShapeDtypeStruct((B, N, C), attn_dtype)),
        grid_spec=pltpu.PrefetchScalarGridSpec(
            num_scalar_prefetch=0,
            grid=(B, NPT),
            in_specs=[
                pl.BlockSpec((1, TN, C), lambda b, j: (b, j, 0)),   # x rows
                pl.BlockSpec((C, C8), lambda b, j: (0, 0)),         # Wk
                pl.BlockSpec((C8, 1), lambda b, j: (0, 0)),         # bk
                pl.BlockSpec((C, C), lambda b, j: (0, 0)),          # Wv
                pl.BlockSpec((1, C), lambda b, j: (0, 0)),          # bv
            ],
            out_specs=[
                pl.BlockSpec((1, C8, TN), lambda b, j: (b, 0, j)),  # kT
                pl.BlockSpec((1, TN, C), lambda b, j: (b, j, 0)),   # v
            ]),
        compiler_params=pltpu.CompilerParams(
            dimension_semantics=("parallel", "parallel"),
            vmem_limit_bytes=vmem_limit),
        cost_estimate=pl.CostEstimate(
            flops=int(proj_flops), transcendentals=0,
            bytes_accessed=int(proj_bytes)),
    )(x_bnc, wk, bk2, wv, bv2)

    # ---------------- attention call ----------------
    attn_flops = 2 * B * (N * C * C8 + N * N * (C8 + C))
    attn_trans = B * N * N
    attn_bytes = 4 * (2 * B * N * C + C * C8 + C8 + 1) + ab * B * N * (C8 + C)

    kernel = functools.partial(pam_attn_kernel, attn_dtype=attn_dtype,
                               exp_dtype=exp_dtype, tkv=TKV, num_kv=NUM_KV)

    out_bnc = pl.pallas_call(
        kernel,
        out_shape=jax.ShapeDtypeStruct((B, N, C), x_bnc.dtype),
        grid_spec=pltpu.PrefetchScalarGridSpec(
            num_scalar_prefetch=0,
            grid=(B, NT),
            in_specs=[
                pl.BlockSpec((1, TQ, C), lambda b, i: (b, i, 0)),   # x query tile (f32)
                pl.BlockSpec((1, C8, N), lambda b, i: (b, 0, 0)),   # kT (bf16), per-b
                pl.BlockSpec((1, N, C), lambda b, i: (b, 0, 0)),    # v  (bf16), per-b
                pl.BlockSpec((C, C8), lambda b, i: (0, 0)),         # Wq
                pl.BlockSpec((1, C8), lambda b, i: (0, 0)),         # bq
                pl.BlockSpec(memory_space=pltpu.MemorySpace.SMEM),  # gamma scalar
            ],
            out_specs=pl.BlockSpec((1, TQ, C), lambda b, i: (b, i, 0)),
            scratch_shapes=[
                pltpu.VMEM((TQ, 1), jnp.float32),   # running max
                pltpu.VMEM((TQ, 1), jnp.float32),   # running sum
                pltpu.VMEM((TQ, C), jnp.float32),   # output accumulator
            ]),
        compiler_params=pltpu.CompilerParams(
            # No cross-iteration state -> both axes megacore-parallel (v7x: the
            # query-tile axis can be split across the two TensorCores).
            dimension_semantics=("parallel", "parallel"),
            vmem_limit_bytes=vmem_limit),
        cost_estimate=pl.CostEstimate(
            flops=int(attn_flops), transcendentals=int(attn_trans),
            bytes_accessed=int(attn_bytes)),
    )(x_bnc, kT, v, wq, bq2, gamma2)

    # (B, N, C) -> NCHW
    return jnp.transpose(out_bnc, (0, 2, 1)).reshape(B, C, H, W)


# ---------------------------------------------------------------------------
# Pure-JAX reference mirroring the PyTorch forward exactly.
# ---------------------------------------------------------------------------
def pam_reference(x_nchw, wq, bq, wk, bk, wv, bv, gamma):
    B, C, H, W = x_nchw.shape
    N = H * W
    x_bnc = jnp.transpose(x_nchw.reshape(B, C, N), (0, 2, 1))        # (B, N, C)
    q = jnp.einsum('bnc,cd->bnd', x_bnc, wq) + bq                     # (B, N, C8)
    k = jnp.einsum('bnc,cd->bnd', x_bnc, wk) + bk                     # (B, N, C8)
    v = jnp.einsum('bnc,cd->bnd', x_bnc, wv) + bv                     # (B, N, C)
    energy = jnp.einsum('bnd,bmd->bnm', q, k)                         # (B, N, N)
    attention = jax.nn.softmax(energy, axis=-1)
    out = jnp.einsum('bnm,bmc->bnc', attention, v)                    # (B, N, C)
    out = gamma[0] * out + x_bnc
    return jnp.transpose(out, (0, 2, 1)).reshape(B, C, H, W)


if __name__ == "__main__":
    key = jax.random.PRNGKey(0)
    B, C, H, W = 2, 16, 16, 16        # in_dim = 16 -> C//8 = 2, N = 256
    C8 = C // 8

    k_x, k_wq, k_bq, k_wk, k_bk, k_wv, k_bv = jax.random.split(key, 7)
    x = jax.random.normal(k_x, (B, C, H, W), dtype=jnp.float32)

    # Conv2d(C, C_out, 1) weights stored in (C_in, C_out) layout
    # (== torch weight[:, :, 0, 0].T).  Deterministic synthetic init.
    wq = 0.1 * jax.random.normal(k_wq, (C, C8), dtype=jnp.float32)
    bq = 0.1 * jax.random.normal(k_bq, (C8,), dtype=jnp.float32)
    wk = 0.1 * jax.random.normal(k_wk, (C, C8), dtype=jnp.float32)
    bk = 0.1 * jax.random.normal(k_bk, (C8,), dtype=jnp.float32)
    wv = 0.1 * jax.random.normal(k_wv, (C, C), dtype=jnp.float32)
    bv = 0.1 * jax.random.normal(k_bv, (C,), dtype=jnp.float32)
    # PyTorch initializes gamma to 0 (out == x); use a non-zero value so the
    # attention path is actually exercised.
    gamma = jnp.array([0.5], dtype=jnp.float32)

    ref = pam_reference(x, wq, bq, wk, bk, wv, bv, gamma)

    # Default fast path: bf16 attention operands (+ bf16 exp on v6e/v7x).
    out_fast = jax.block_until_ready(
        pam_forward(x, wq, bq, wk, bk, wv, bv, gamma))
    np.testing.assert_allclose(np.asarray(out_fast), np.asarray(ref),
                               rtol=3e-2, atol=3e-2)

    # Full-f32 path (tighter check of the kernel structure itself).
    out_f32 = jax.block_until_ready(
        pam_forward(x, wq, bq, wk, bk, wv, bv, gamma,
                    use_bf16_matmul=False, bf16_exp=False))
    np.testing.assert_allclose(np.asarray(out_f32), np.asarray(ref),
                               rtol=2e-3, atol=2e-3)

    print("KERNEL_OK")
</pallas_src>

<mosaic_0001>
module attributes {stable_mosaic.version = 11 : i64} {
  func.func @kv_proj_kernel(%arg0: i32, %arg1: i32, %arg2: memref<1x256x16xf32, #tpu.memory_space<vmem>>, %arg3: memref<16x2xf32, #tpu.memory_space<vmem>>, %arg4: memref<2x1xf32, #tpu.memory_space<vmem>>, %arg5: memref<16x16xf32, #tpu.memory_space<vmem>>, %arg6: memref<1x16xf32, #tpu.memory_space<vmem>>, %arg7: memref<1x2x256xbf16, #tpu.memory_space<vmem>>, %arg8: memref<1x256x16xbf16, #tpu.memory_space<vmem>>) attributes {dimension_semantics = [#tpu.dimension_semantics<parallel>, #tpu.dimension_semantics<parallel>], iteration_bounds = array<i64: 2, 1>, scalar_prefetch = 0 : i64, scratch_operands = 0 : i64, tpu.core_type = #tpu.core_type<tc>, window_params = [{transform_indices = @transform_0, window_bounds = array<i64: 1, 256, 16>}, {pipeline_mode = #tpu.pipeline_mode<synchronous>, transform_indices = @transform_1, window_bounds = array<i64: 16, 2>}, {pipeline_mode = #tpu.pipeline_mode<synchronous>, transform_indices = @transform_2, window_bounds = array<i64: 2, 1>}, {pipeline_mode = #tpu.pipeline_mode<synchronous>, transform_indices = @transform_3, window_bounds = array<i64: 16, 16>}, {pipeline_mode = #tpu.pipeline_mode<synchronous>, transform_indices = @transform_4, window_bounds = array<i64: 1, 16>}, {transform_indices = @transform_5, window_bounds = array<i64: 1, 2, 256>}, {transform_indices = @transform_6, window_bounds = array<i64: 1, 256, 16>}]} {
    %c0 = arith.constant 0 : index
    %c0_0 = arith.constant 0 : index
    %c0_1 = arith.constant 0 : index
    %0 = vector.load %arg2[%c0, %c0_0, %c0_1] : memref<1x256x16xf32, #tpu.memory_space<vmem>>, vector<1x256x16xf32>
    %1 = vector.shape_cast %0 : vector<1x256x16xf32> to vector<256x16xf32>
    %c0_2 = arith.constant 0 : index
    %c0_3 = arith.constant 0 : index
    %2 = vector.load %arg3[%c0_2, %c0_3] : memref<16x2xf32, #tpu.memory_space<vmem>>, vector<16x2xf32>
    %cst = arith.constant dense<0.000000e+00> : vector<2x256xf32>
    %3 = tpu.matmul %2, %1, %cst {dimension_numbers = #tpu.dot_dimension_numbers<[0], [1], [1], [0], [0, 1, 1, 0], [], []>} : vector<16x2xf32>, vector<256x16xf32>, vector<2x256xf32> -> vector<2x256xf32>
    %c0_4 = arith.constant 0 : index
    %c0_5 = arith.constant 0 : index
    %4 = vector.load %arg4[%c0_4, %c0_5] : memref<2x1xf32, #tpu.memory_space<vmem>>, vector<2x1xf32>
    %5 = vector.broadcast %4 : vector<2x1xf32> to vector<2x256xf32>
    %6 = arith.addf %3, %5 : vector<2x256xf32>
    %7 = arith.truncf %6 : vector<2x256xf32> to vector<2x256xbf16>
    %c0_6 = arith.constant 0 : index
    %c0_7 = arith.constant 0 : index
    %c0_8 = arith.constant 0 : index
    %8 = vector.load %arg7[%c0_6, %c0_7, %c0_8] : memref<1x2x256xbf16, #tpu.memory_space<vmem>>, vector<1x2x256xbf16>
    %9 = vector.shape_cast %8 : vector<1x2x256xbf16> to vector<2x256xbf16>
    %10 = vector.shape_cast %7 : vector<2x256xbf16> to vector<1x2x256xbf16>
    tpu.vector_store %arg7[%c0_6, %c0_7, %c0_8], %10 {strides = array<i32>} : memref<1x2x256xbf16, #tpu.memory_space<vmem>>, vector<1x2x256xbf16>,
    %c0_9 = arith.constant 0 : index
    %c0_10 = arith.constant 0 : index
    %11 = vector.load %arg5[%c0_9, %c0_10] : memref<16x16xf32, #tpu.memory_space<vmem>>, vector<16x16xf32>
    %cst_11 = arith.constant dense<0.000000e+00> : vector<256x16xf32>
    %12 = tpu.matmul %1, %11, %cst_11 {dimension_numbers = #tpu.dot_dimension_numbers<[1], [0], [0], [1], [0, 0, 1, 1], [], []>} : vector<256x16xf32>, vector<16x16xf32>, vector<256x16xf32> -> vector<256x16xf32>
    %c0_12 = arith.constant 0 : index
    %c0_13 = arith.constant 0 : index
    %13 = vector.load %arg6[%c0_12, %c0_13] : memref<1x16xf32, #tpu.memory_space<vmem>>, vector<1x16xf32>
    %14 = vector.broadcast %13 : vector<1x16xf32> to vector<256x16xf32>
    %15 = arith.addf %12, %14 : vector<256x16xf32>
    %16 = arith.truncf %15 : vector<256x16xf32> to vector<256x16xbf16>
    %c0_14 = arith.constant 0 : index
    %c0_15 = arith.constant 0 : index
    %c0_16 = arith.constant 0 : index
    %17 = vector.load %arg8[%c0_14, %c0_15, %c0_16] : memref<1x256x16xbf16, #tpu.memory_space<vmem>>, vector<1x256x16xbf16>
    %18 = vector.shape_cast %17 : vector<1x256x16xbf16> to vector<256x16xbf16>
    %19 = vector.shape_cast %16 : vector<256x16xbf16> to vector<1x256x16xbf16>
    tpu.vector_store %arg8[%c0_14, %c0_15, %c0_16], %19 {strides = array<i32>} : memref<1x256x16xbf16, #tpu.memory_space<vmem>>, vector<1x256x16xbf16>,
    return
  }
  func.func @transform_0(%arg0: i32, %arg1: i32) -> (i32, i32, i32) {
    %c0_i32 = arith.constant 0 : i32
    %c0_i32_0 = arith.constant 0 : i32
    return %arg0, %arg1, %c0_i32 : i32, i32, i32
  }
  func.func @transform_1(%arg0: i32, %arg1: i32) -> (i32, i32) {
    %c0_i32 = arith.constant 0 : i32
    %c0_i32_0 = arith.constant 0 : i32
    %c0_i32_1 = arith.constant 0 : i32
    return %c0_i32, %c0_i32_0 : i32, i32
  }
  func.func @transform_2(%arg0: i32, %arg1: i32) -> (i32, i32) {
    %c0_i32 = arith.constant 0 : i32
    %c0_i32_0 = arith.constant 0 : i32
    %c0_i32_1 = arith.constant 0 : i32
    return %c0_i32, %c0_i32_0 : i32, i32
  }
  func.func @transform_3(%arg0: i32, %arg1: i32) -> (i32, i32) {
    %c0_i32 = arith.constant 0 : i32
    %c0_i32_0 = arith.constant 0 : i32
    %c0_i32_1 = arith.constant 0 : i32
    return %c0_i32, %c0_i32_0 : i32, i32
  }
  func.func @transform_4(%arg0: i32, %arg1: i32) -> (i32, i32) {
    %c0_i32 = arith.constant 0 : i32
    %c0_i32_0 = arith.constant 0 : i32
    %c0_i32_1 = arith.constant 0 : i32
    return %c0_i32, %c0_i32_0 : i32, i32
  }
  func.func @transform_5(%arg0: i32, %arg1: i32) -> (i32, i32, i32) {
    %c0_i32 = arith.constant 0 : i32
    %c0_i32_0 = arith.constant 0 : i32
    return %arg0, %c0_i32, %arg1 : i32, i32, i32
  }
  func.func @transform_6(%arg0: i32, %arg1: i32) -> (i32, i32, i32) {
    %c0_i32 = arith.constant 0 : i32
    %c0_i32_0 = arith.constant 0 : i32
    return %arg0, %arg1, %c0_i32 : i32, i32, i32
  }
}

</mosaic_0001>

<llo_original>
// kernel: tpu_custom_call.1
$region0: #{tpu_custom_call.1}
  #allocation0 [shape = 'u32[]', space=smem, size = 0x4, offset = 0x4, fixed_abs, tag = 'smem constant byte address 0x4 - core index']
  #allocation1 [shape = 'u32[144,128]{1,0:T(1,128)}', space=vmem, size = 0x12000, scoped, tag = 'internal scratch']
  %s0 = inlined_call_operand.vmem [shape: f32[2,256,16], index: 0, kind: input, shape index: {}]
  %s1 = inlined_call_operand.vmem [shape: f32[16,2], index: 1, kind: input, shape index: {}]
  %s2 = inlined_call_operand.vmem [shape: f32[2,1], index: 2, kind: input, shape index: {}]
  %s3 = inlined_call_operand.vmem [shape: f32[16,16], index: 3, kind: input, shape index: {}]
  %s4 = inlined_call_operand.vmem [shape: f32[1,16], index: 4, kind: input, shape index: {}]
  %s5 = inlined_call_operand.hbm [shape: bf16[2,2,256], index: 5, kind: output, shape index: {0}]
  %s6 = inlined_call_operand.vmem [shape: bf16[2,256,16], index: 6, kind: output, shape index: {1}]
  %7 = xla_tuple %s5, %s6
  %s8 = sld [smem:[#allocation0]]
  $region61: #{tpu_custom_call.1} parent=0
    _
  %s10 = ssub.s32 1, %s8
  %s11 = scalar_select 0, %s10, %s8
  $region1: #{tpu_custom_call.1} parent=0
    #allocation2 [shape = 'u8[2048]{0}', space=vmem, size = 0x800, scoped, tag = 'output window, operand 0']
    #allocation3 [shape = 's32[2]{0}', space=sflag, size = 0x8, scoped, tag = 'scoped memory for tpu_custom_call.1']
    %12 = vsyncpa [#allocation3], 0
    %s13 = scalar_lea.sflag [#allocation3], 1
    %14 = vsyncpa %s13, 0
    loop: start=0, step=1, limit=4
    $region2: #{tpu_custom_call.1} parent=1 // loop_pre_header
      _
    $region3: #{tpu_custom_call.1} parent=1 // loop_header
      %s16 = sphi 0, %s20
      %p17 = scmp.ge.s32.totalorder %s16, 4
      %s23 = sphi 0, %s35
      %s24 = sphi 0, %s31
      %s25 = sphi 0, %s23
      %s26 = sphi 0, %s24
      %s27 = sphi 0, %s25
      %s28 = sphi 0, %s26
      %s40 = sphi 0, %s42
      %s43 = sphi 0, %s40
      %s44 = sphi 0, %s43
      %s60 = sphi 0, %s44
      %s64 = sphi 0, %s64
      %s66 = sphi 0, %s64
      %s67 = sphi 0, %s66
      %s81 = sphi 0, %s67
      %s85 = sphi 0, %s85
      %s87 = sphi 0, %s85
      %s88 = sphi 0, %s87
      %s102 = sphi 0, %s88
      %s106 = sphi 0, %s106
      %s108 = sphi 0, %s106
      %s109 = sphi 0, %s108
      %s123 = sphi 0, %s109
      %s127 = sphi 0, %s127
      %s129 = sphi 0, %s127
      %s130 = sphi 0, %s129
      %s144 = sphi 0, %s130
      %s152 = sphi 0, %s154
      %s155 = sphi 0, %s152
      %s156 = sphi 0, %s155
      %s172 = sphi 0, %s156
      %s180 = sphi 0, %s182
      %s183 = sphi 0, %s180
      %s184 = sphi 0, %s183
      %s200 = sphi 0, %s184
    $region4: #{tpu_custom_call.1} parent=1 // loop_header_branch
      %19 = sbr.rel (%p17) target = $region8
    $region5: #{tpu_custom_call.1} parent=1 // loop_body
      %s21 = ssub.s32 %s16, 1
      %s22 = ssub.s32 %s16, 2
      %s29 = sadd.s32 1, %s24
      %p30 = scmp.ge.s32.totalorder %s29, 1
      %s31 = scalar_select %p30, 0, %s29
      %s32 = sadd.s32 1, %s23
      %s33 = scalar_select %p30, %s32, %s23
      %p34 = scmp.ge.s32.totalorder %s33, 2
      %s35 = scalar_select %p34, 0, %s33
      %s36 = ssub.s32 %s23, %s35
      %s37 = ssub.s32 %s24, %s31
      %s38 = sor.u32 %s36, %s37
      %p39 = scmp.eq.s32.totalorder %s38, 0
      %s41 = sadd.s32 %s40, 1
      %s42 = scalar_select %p39, %s40, %s41
      %p45 = pneg %p39
      %p46 = scmp.eq.s32.totalorder %s16, 1
      %p47 = por %p45, %p46
      %p48 = scmp.ne.s32.totalorder %s40, %s43
      %p49 = scmp.eq.s32.totalorder %s16, 0
      %p50 = por %p48, %p49
      %p51 = scmp.ne.s32.totalorder %s40, %s43
      %p52 = scmp.eq.s32.totalorder %s21, 1
      %p53 = por %p51, %p52
      %p54 = scmp.ne.s32.totalorder %s43, %s44
      %p55 = scmp.eq.s32.totalorder %s21, 0
      %p56 = por %p54, %p55
      %p57 = scmp.ne.s32.totalorder %s43, %s44
      %p58 = scmp.eq.s32.totalorder %s22, 1
      %p59 = por %p57, %p58
      %p61 = scmp.ne.s32.totalorder %s44, %s60
      %p62 = scmp.eq.s32.totalorder %s22, 0
      %p63 = por %p61, %p62
      %s65 = sadd.s32 %s64, 1
      %p68 = scmp.eq.s32.totalorder %s16, 1
      %p69 = scmp.ne.s32.totalorder %s64, %s66
      %p70 = scmp.eq.s32.totalorder %s16, 0
      %p71 = por %p69, %p70
      %p72 = scmp.ne.s32.totalorder %s64, %s66
      %p73 = scmp.eq.s32.totalorder %s21, 1
      %p74 = por %p72, %p73
      %p75 = scmp.ne.s32.totalorder %s66, %s67
      %p76 = scmp.eq.s32.totalorder %s21, 0
      %p77 = por %p75, %p76
      %p78 = scmp.ne.s32.totalorder %s66, %s67
      %p79 = scmp.eq.s32.totalorder %s22, 1
      %p80 = por %p78, %p79
      %p82 = scmp.ne.s32.totalorder %s67, %s81
      %p83 = scmp.eq.s32.totalorder %s22, 0
      %p84 = por %p82, %p83
      %s86 = sadd.s32 %s85, 1
      %p89 = scmp.eq.s32.totalorder %s16, 1
      %p90 = scmp.ne.s32.totalorder %s85, %s87
      %p91 = scmp.eq.s32.totalorder %s16, 0
      %p92 = por %p90, %p91
      %p93 = scmp.ne.s32.totalorder %s85, %s87
      %p94 = scmp.eq.s32.totalorder %s21, 1
      %p95 = por %p93, %p94
      %p96 = scmp.ne.s32.totalorder %s87, %s88
      %p97 = scmp.eq.s32.totalorder %s21, 0
      %p98 = por %p96, %p97
      %p99 = scmp.ne.s32.totalorder %s87, %s88
      %p100 = scmp.eq.s32.totalorder %s22, 1
      %p101 = por %p99, %p100
      %p103 = scmp.ne.s32.totalorder %s88, %s102
      %p104 = scmp.eq.s32.totalorder %s22, 0
      %p105 = por %p103, %p104
      %s107 = sadd.s32 %s106, 1
      %p110 = scmp.eq.s32.totalorder %s16, 1
      %p111 = scmp.ne.s32.totalorder %s106, %s108
      %p112 = scmp.eq.s32.totalorder %s16, 0
      %p113 = por %p111, %p112
      %p114 = scmp.ne.s32.totalorder %s106, %s108
      %p115 = scmp.eq.s32.totalorder %s21, 1
      %p116 = por %p114, %p115
      %p117 = scmp.ne.s32.totalorder %s108, %s109
      %p118 = scmp.eq.s32.totalorder %s21, 0
      %p119 = por %p117, %p118
      %p120 = scmp.ne.s32.totalorder %s108, %s109
      %p121 = scmp.eq.s32.totalorder %s22, 1
      %p122 = por %p120, %p121
      %p124 = scmp.ne.s32.totalorder %s109, %s123
      %p125 = scmp.eq.s32.totalorder %s22, 0
      %p126 = por %p124, %p125
      %s128 = sadd.s32 %s127, 1
      %p131 = scmp.eq.s32.totalorder %s16, 1
      %p132 = scmp.ne.s32.totalorder %s127, %s129
      %p133 = scmp.eq.s32.totalorder %s16, 0
      %p134 = por %p132, %p133
      %p135 = scmp.ne.s32.totalorder %s127, %s129
      %p136 = scmp.eq.s32.totalorder %s21, 1
      %p137 = por %p135, %p136
      %p138 = scmp.ne.s32.totalorder %s129, %s130
      %p139 = scmp.eq.s32.totalorder %s21, 0
      %p140 = por %p138, %p139
      %p141 = scmp.ne.s32.totalorder %s129, %s130
      %p142 = scmp.eq.s32.totalorder %s22, 1
      %p143 = por %p141, %p142
      %p145 = scmp.ne.s32.totalorder %s130, %s144
      %p146 = scmp.eq.s32.totalorder %s22, 0
      %p147 = por %p145, %p146
      %s148 = ssub.s32 %s23, %s35
      %s149 = ssub.s32 %s24, %s31
      %s150 = sor.u32 %s148, %s149
      %p151 = scmp.eq.s32.totalorder %s150, 0
      %s153 = sadd.s32 %s152, 1
      %s154 = scalar_select %p151, %s152, %s153
      %p157 = pneg %p151
      %p158 = scmp.eq.s32.totalorder %s16, 1
      %p159 = por %p157, %p158
      %p160 = scmp.ne.s32.totalorder %s152, %s155
      %p161 = scmp.eq.s32.totalorder %s16, 0
      %p162 = por %p160, %p161
      %p163 = scmp.ne.s32.totalorder %s152, %s155
      %p164 = scmp.eq.s32.totalorder %s21, 1
      %p165 = por %p163, %p164
      %p166 = scmp.ne.s32.totalorder %s155, %s156
      %p167 = scmp.eq.s32.totalorder %s21, 0
      %p168 = por %p166, %p167
      %p169 = scmp.ne.s32.totalorder %s155, %s156
      %p170 = scmp.eq.s32.totalorder %s22, 1
      %p171 = por %p169, %p170
      %p173 = scmp.ne.s32.totalorder %s156, %s172
      %p174 = scmp.eq.s32.totalorder %s22, 0
      %p175 = por %p173, %p174
      %s176 = ssub.s32 %s23, %s35
      %s177 = ssub.s32 %s24, %s31
      %s178 = sor.u32 %s176, %s177
      %p179 = scmp.eq.s32.totalorder %s178, 0
      %s181 = sadd.s32 %s180, 1
      %s182 = scalar_select %p179, %s180, %s181
      %p185 = pneg %p179
      %p186 = scmp.eq.s32.totalorder %s16, 1
      %p187 = por %p185, %p186
      %p188 = scmp.ne.s32.totalorder %s180, %s183
      %p189 = scmp.eq.s32.totalorder %s16, 0
      %p190 = por %p188, %p189
      %p191 = scmp.ne.s32.totalorder %s180, %s183
      %p192 = scmp.eq.s32.totalorder %s21, 1
      %p193 = por %p191, %p192
      %p194 = scmp.ne.s32.totalorder %s183, %s184
      %p195 = scmp.eq.s32.totalorder %s21, 0
      %p196 = por %p194, %p195
      %p197 = scmp.ne.s32.totalorder %s183, %s184
      %p198 = scmp.eq.s32.totalorder %s22, 1
      %p199 = por %p197, %p198
      %p201 = scmp.ne.s32.totalorder %s184, %s200
      %p202 = scmp.eq.s32.totalorder %s22, 0
      %p203 = por %p201, %p202
      %p204 = scmp.le.s32.totalorder 1, %s16
      %p205 = scmp.lt.s32.totalorder %s16, 3
      %p206 = pnand %p204, %p205
      %p207 = pneg %p206
      // Predicated region
      $region9: #{tpu_custom_call.1} parent=5 // pred_check
        _
      $region10: #{tpu_custom_call.1} parent=5 // pred_check_branch
        %209 = sbr.rel (%p206) target = $region12
      $region11: #{tpu_custom_call.1} parent=5 // pred_region
        %s210 = ssub.s32 %s16, 1
        // Predicated region
        $region13: #{tpu_custom_call.1} parent=11 // pred_check
          %p211 = pneg %p77
        $region14: #{tpu_custom_call.1} parent=11 // pred_check_branch
          %213 = sbr.rel (%p211) target = $region16
        $region15: #{tpu_custom_call.1} parent=11 // pred_region
          _
        $region16: #{tpu_custom_call.1} parent=11 // pred_fallthru
          _
        // Predicated region
        $region17: #{tpu_custom_call.1} parent=11 // pred_check
          %p214 = pneg %p98
        $region18: #{tpu_custom_call.1} parent=11 // pred_check_branch
          %216 = sbr.rel (%p214) target = $region20
        $region19: #{tpu_custom_call.1} parent=11 // pred_region
          _
        $region20: #{tpu_custom_call.1} parent=11 // pred_fallthru
          _
        // Predicated region
        $region21: #{tpu_custom_call.1} parent=11 // pred_check
          %p217 = pneg %p119
        $region22: #{tpu_custom_call.1} parent=11 // pred_check_branch
          %219 = sbr.rel (%p217) target = $region24
        $region23: #{tpu_custom_call.1} parent=11 // pred_region
          _
        $region24: #{tpu_custom_call.1} parent=11 // pred_fallthru
          _
        // Predicated region
        $region25: #{tpu_custom_call.1} parent=11 // pred_check
          %p220 = pneg %p140
        $region26: #{tpu_custom_call.1} parent=11 // pred_check_branch
          %222 = sbr.rel (%p220) target = $region28
        $region27: #{tpu_custom_call.1} parent=11 // pred_region
          _
        $region28: #{tpu_custom_call.1} parent=11 // pred_fallthru
          _
      $region12: #{tpu_custom_call.1} parent=5 // pred_fallthru
        _
      %p223 = scmp.lt.s32.totalorder %s16, 2
      // Predicated region
      $region29: #{tpu_custom_call.1} parent=5 // pred_check
        %p224 = pneg %p223
      $region30: #{tpu_custom_call.1} parent=5 // pred_check_branch
        %226 = sbr.rel (%p224) target = $region32
      $region31: #{tpu_custom_call.1} parent=5 // pred_region
        // Predicated region
        $region33: #{tpu_custom_call.1} parent=31 // pred_check
          %p227 = pneg %p50
        $region34: #{tpu_custom_call.1} parent=31 // pred_check_branch
          %229 = sbr.rel (%p227) target = $region36
        $region35: #{tpu_custom_call.1} parent=31 // pred_region
          %s230 = smul.u32 32, %s24
          %p231 = scmp.lt.s32.totalorder %s23, 1
          %s232 = scalar_select %p231, %s23, 1
          %p233 = scmp.lt.s32.totalorder %s230, 31
          %s234 = scalar_select %p233, %s230, 31
          %s235 = smul.addr %s232, 32
          %s236 = sadd.s32 %s234, %s235
          %s237 = smul.addr %s236, 8
          %s238 = scalar_lea.vmem %s0, %s237
          %s239 = smul.u32 32, %s24
        $region36: #{tpu_custom_call.1} parent=31 // pred_fallthru
          _
      $region32: #{tpu_custom_call.1} parent=5 // pred_fallthru
        _
      %p240 = scmp.le.s32.totalorder 1, %s16
      %p241 = scmp.lt.s32.totalorder %s16, 3
      %p242 = pnand %p240, %p241
      %p243 = pneg %p242
      // Predicated region
      $region37: #{tpu_custom_call.1} parent=5 // pred_check
        _
      $region38: #{tpu_custom_call.1} parent=5 // pred_check_branch
        %245 = sbr.rel (%p242) target = $region40
      $region39: #{tpu_custom_call.1} parent=5 // pred_region
        %s246 = ssub.s32 %s16, 1
        %s247 = smul.u32 32, %s26
        %p248 = scmp.lt.s32.totalorder %s25, 1
        %s249 = scalar_select %p248, %s25, 1
        %p250 = scmp.lt.s32.totalorder %s247, 31
        %s251 = scalar_select %p250, %s247, 31
        %s252 = smul.addr %s249, 32
        %s253 = sadd.s32 %s251, %s252
        %s254 = smul.addr %s253, 8
        %s255 = scalar_lea.vmem %s0, %s254
        %p256 = pneg %p56
        %p257 = pneg %p53
        %p258 = pneg %p77
        %p259 = pneg %p74
        %p260 = pneg %p98
        %p261 = pneg %p95
        %p262 = pneg %p119
        %p263 = pneg %p116
        %p264 = pneg %p140
        %p265 = pneg %p137
        %p266 = pneg %p168
        %p267 = pneg %p165
        %s268 = sand.u32 %s155, 1
        %s269 = scalar_lea.sflag [#allocation3], %s268
        %s270 = sand.u32 %s155, 1
        %s271 = smul.addr %s270, 2
        %s272 = scalar_lea.vmem [#allocation2], %s271
        %p273 = pneg %p196
        %p274 = pneg %p193
        %s275 = smul.u32 32, %s26
        %p276 = scmp.lt.s32.totalorder %s25, 1
        %s277 = scalar_select %p276, %s25, 1
        %p278 = scmp.lt.s32.totalorder %s275, 31
        %s279 = scalar_select %p278, %s275, 31
        %s280 = smul.addr %s277, 32
        %s281 = sadd.s32 %s279, %s280
        %s282 = smul.addr %s281, 4
        %s283 = scalar_lea.vmem %s6, %s282
        %s284 = smul.u32 32, %s26
        %p285 = scmp.lt.s32.totalorder %s25, 1
        %s286 = scalar_select %p285, %s25, 1
        %p287 = scmp.lt.s32.totalorder %s284, 31
        %s288 = scalar_select %p287, %s284, 31
        %s289 = smul.addr %s286, 32
        %s290 = sadd.s32 %s288, %s289
        %s291 = smul.addr %s290, 8
        %s292 = scalar_lea.vmem %s0, %s291
        %s293 = smul.u32 32, %s26
        %s294 = smul.u32 2, %s26
        %s295 = smul.u32 32, %s26
        %p296 = scmp.lt.s32.totalorder %s25, 1
        %s297 = scalar_select %p296, %s25, 1
        %p298 = scmp.lt.s32.totalorder %s295, 31
        %s299 = scalar_select %p298, %s295, 31
        %s300 = smul.addr %s297, 32
        %s301 = sadd.s32 %s299, %s300
        %s302 = smul.addr %s301, 4
        %s303 = scalar_lea.vmem %s6, %s302
        %s304 = smul.u32 32, %s26
        %v305 = vld [vmem:[%s292] sm:$0xff]
        %v306 = vld [vmem:[%s292 + $0x8] sm:$0xff]
        %v307 = vld [vmem:[%s292 + $0x10] sm:$0xff]
        %v308 = vld [vmem:[%s292 + $0x18] sm:$0xff]
        %v309 = vld [vmem:[%s292 + $0x20] sm:$0xff]
        %v310 = vld [vmem:[%s292 + $0x28] sm:$0xff]
        %v311 = vld [vmem:[%s292 + $0x30] sm:$0xff]
        %v312 = vld [vmem:[%s292 + $0x38] sm:$0xff]
        %v313 = vld [vmem:[%s292 + $0x40] sm:$0xff]
        %v314 = vld [vmem:[%s292 + $0x48] sm:$0xff]
        %v315 = vld [vmem:[%s292 + $0x50] sm:$0xff]
        %v316 = vld [vmem:[%s292 + $0x58] sm:$0xff]
        %v317 = vld [vmem:[%s292 + $0x60] sm:$0xff]
        %v318 = vld [vmem:[%s292 + $0x68] sm:$0xff]
        %v319 = vld [vmem:[%s292 + $0x70] sm:$0xff]
        %v320 = vld [vmem:[%s292 + $0x78] sm:$0xff]
        %v321 = vld [vmem:[%s292 + $0x80] sm:$0xff]
        %v322 = vld [vmem:[%s292 + $0x88] sm:$0xff]
        %v323 = vld [vmem:[%s292 + $0x90] sm:$0xff]
        %v324 = vld [vmem:[%s292 + $0x98] sm:$0xff]
        %v325 = vld [vmem:[%s292 + $0xa0] sm:$0xff]
        %v326 = vld [vmem:[%s292 + $0xa8] sm:$0xff]
        %v327 = vld [vmem:[%s292 + $0xb0] sm:$0xff]
        %v328 = vld [vmem:[%s292 + $0xb8] sm:$0xff]
        %v329 = vld [vmem:[%s292 + $0xc0] sm:$0xff]
        %v330 = vld [vmem:[%s292 + $0xc8] sm:$0xff]
        %v331 = vld [vmem:[%s292 + $0xd0] sm:$0xff]
        %v332 = vld [vmem:[%s292 + $0xd8] sm:$0xff]
        %v333 = vld [vmem:[%s292 + $0xe0] sm:$0xff]
        %v334 = vld [vmem:[%s292 + $0xe8] sm:$0xff]
        %v335 = vld [vmem:[%s292 + $0xf0] sm:$0xff]
        %v336 = vld [vmem:[%s292 + $0xf8] sm:$0xff]
        %v337 = vld [vmem:[%s1] sm:$0xff]
        %v338 = vld [vmem:[%s1 + $0x8] sm:$0xff]
        %v339 = vld [vmem:[%s2] sm:$0x3]
        %341 = vset.pattern.permute.xlu0 0
        %342 = vperm.xlu0 %341, %v339
        %v343 = vpop.permute.xlu0 %342
        %345 = vxpose.xlu0.b32.start [1/16] %v337, 128
        %346 = vxpose.xlu0.b32.cont [2/16] %v338, 128
        %347 = vxpose.xlu0.b32.cont [3/16] 0.0, 128
        %348 = vxpose.xlu0.b32.cont [4/16] 0.0, 128
        %349 = vxpose.xlu0.b32.cont [5/16] 0.0, 128
        %350 = vxpose.xlu0.b32.cont [6/16] 0.0, 128
        %351 = vxpose.xlu0.b32.cont [7/16] 0.0, 128
        %352 = vxpose.xlu0.b32.cont [8/16] 0.0, 128
        %353 = vxpose.xlu0.b32.cont [9/16] 0.0, 128
        %354 = vxpose.xlu0.b32.cont [10/16] 0.0, 128
        %355 = vxpose.xlu0.b32.cont [11/16] 0.0, 128
        %356 = vxpose.xlu0.b32.cont [12/16] 0.0, 128
        %357 = vxpose.xlu0.b32.cont [13/16] 0.0, 128
        %358 = vxpose.xlu0.b32.cont [14/16] 0.0, 128
        %359 = vxpose.xlu0.b32.cont [15/16] 0.0, 128
        %360 = vxpose.xlu0.b32.end [16/16] 0.0, 128
        %v361 = vpop.trf.xlu0
        %v362 = vpop.trf.xlu0
        %v363 = vpop.trf.xlu0
        %v364 = vpop.trf.xlu0
        %v365 = vpop.trf.xlu0
        %v366 = vpop.trf.xlu0
        %v367 = vpop.trf.xlu0
        %v368 = vpop.trf.xlu0
        %v369 = vpop.trf.xlu0
        %v370 = vpop.trf.xlu0
        %v371 = vpop.trf.xlu0
        %v372 = vpop.trf.xlu0
        %v373 = vpop.trf.xlu0
        %v374 = vpop.trf.xlu0
        %v375 = vpop.trf.xlu0
        %v376 = vpop.trf.xlu0
        %vm377 = vcmask 130048
        %v379 = vsel %vm377, %v361, 0
        %v382 = vsel %vm377, %v305, 0
        %v385 = vsel %vm377, %v306, 0
        %v388 = vsel %vm377, %v307, 0
        %v391 = vsel %vm377, %v308, 0
        %v394 = vsel %vm377, %v309, 0
        %v397 = vsel %vm377, %v310, 0
        %v400 = vsel %vm377, %v311, 0
        %v403 = vsel %vm377, %v312, 0
        %v406 = vsel %vm377, %v313, 0
        %v409 = vsel %vm377, %v314, 0
        %v412 = vsel %vm377, %v315, 0
        %v415 = vsel %vm377, %v316, 0
        %v418 = vsel %vm377, %v317, 0
        %v421 = vsel %vm377, %v318, 0
        %v424 = vsel %vm377, %v319, 0
        %v427 = vsel %vm377, %v320, 0
        %v430 = vsel %vm377, %v321, 0
        %v433 = vsel %vm377, %v322, 0
        %v436 = vsel %vm377, %v323, 0
        %v439 = vsel %vm377, %v324, 0
        %v442 = vsel %vm377, %v325, 0
        %v445 = vsel %vm377, %v326, 0
        %v448 = vsel %vm377, %v327, 0
        %v451 = vsel %vm377, %v328, 0
        %v454 = vsel %vm377, %v329, 0
        %v457 = vsel %vm377, %v330, 0
        %v460 = vsel %vm377, %v331, 0
        %v463 = vsel %vm377, %v332, 0
        %v466 = vsel %vm377, %v333, 0
        %v469 = vsel %vm377, %v334, 0
        %v472 = vsel %vm377, %v335, 0
        %v475 = vsel %vm377, %v336, 0
        %477 = vmatprep.subr.mxu0 0.0
        %478 = vmatpush1.xpose.msra.mxu0 %v427
        %479 = vmatprep.subr.mxu0 0.0
        %480 = vmatpush1.xpose.msra.mxu0 %v424
        %481 = vmatprep.subr.mxu0 0.0
        %482 = vmatpush1.xpose.msra.mxu0 %v421
        %483 = vmatprep.subr.mxu0 0.0
        %484 = vmatpush1.xpose.msra.mxu0 %v418
        %485 = vmatprep.subr.mxu0 0.0
        %486 = vmatpush1.xpose.msra.mxu0 %v415
        %487 = vmatprep.subr.mxu0 0.0
        %488 = vmatpush1.xpose.msra.mxu0 %v412
        %489 = vmatprep.subr.mxu0 0.0
        %490 = vmatpush1.xpose.msra.mxu0 %v409
        %491 = vmatprep.subr.mxu0 0.0
        %492 = vmatpush1.xpose.msra.mxu0 %v406
        %493 = vmatprep.subr.mxu0 0.0
        %494 = vmatpush1.xpose.msra.mxu0 %v403
        %495 = vmatprep.subr.mxu0 0.0
        %496 = vmatpush1.xpose.msra.mxu0 %v400
        %497 = vmatprep.subr.mxu0 0.0
        %498 = vmatpush1.xpose.msra.mxu0 %v397
        %499 = vmatprep.subr.mxu0 0.0
        %500 = vmatpush1.xpose.msra.mxu0 %v394
        %501 = vmatprep.subr.mxu0 0.0
        %502 = vmatpush1.xpose.msra.mxu0 %v391
        %503 = vmatprep.subr.mxu0 0.0
        %504 = vmatpush1.xpose.msra.mxu0 %v388
        %505 = vmatprep.subr.mxu0 0.0
        %506 = vmatpush1.xpose.msra.mxu0 %v385
        %507 = vmatprep.subr.mxu0 0.0
        %508 = vmatpush1.xpose.msra.mxu0 %v382
        %509 = vmatprep.subr.mxu0 0.0
        %510 = vmatpush2.xpose.msra.mxu0 %v475
        %511 = vmatprep.subr.mxu0 0.0
        %512 = vmatpush2.xpose.msra.mxu0 %v472
        %513 = vmatprep.subr.mxu0 0.0
        %514 = vmatpush2.xpose.msra.mxu0 %v469
        %515 = vmatprep.subr.mxu0 0.0
        %516 = vmatpush2.xpose.msra.mxu0 %v466
        %517 = vmatprep.subr.mxu0 0.0
        %518 = vmatpush2.xpose.msra.mxu0 %v463
        %519 = vmatprep.subr.mxu0 0.0
        %520 = vmatpush2.xpose.msra.mxu0 %v460
        %521 = vmatprep.subr.mxu0 0.0
        %522 = vmatpush2.xpose.msra.mxu0 %v457
        %523 = vmatprep.subr.mxu0 0.0
        %524 = vmatpush2.xpose.msra.mxu0 %v454
        %525 = vmatprep.subr.mxu0 0.0
        %526 = vmatpush2.xpose.msra.mxu0 %v451
        %527 = vmatprep.subr.mxu0 0.0
        %528 = vmatpush2.xpose.msra.mxu0 %v448
        %529 = vmatprep.subr.mxu0 0.0
        %530 = vmatpush2.xpose.msra.mxu0 %v445
        %531 = vmatprep.subr.mxu0 0.0
        %532 = vmatpush2.xpose.msra.mxu0 %v442
        %533 = vmatprep.subr.mxu0 0.0
        %534 = vmatpush2.xpose.msra.mxu0 %v439
        %535 = vmatprep.subr.mxu0 0.0
        %536 = vmatpush2.xpose.msra.mxu0 %v436
        %537 = vmatprep.subr.mxu0 0.0
        %538 = vmatpush2.xpose.msra.mxu0 %v433
        %539 = vmatprep.subr.mxu0 0.0
        %540 = vmatpush2.xpose.msra.mxu0 %v430
        %541 = vmatprep.mubr.f32.mxu0 0.0
        %542 = vmatmul.mubr.f32.gmra.mxu0 %v379
        %v543 = vpop.f32.mrf.mxu0
        %v544 = vadd.f32 %v343, %v543
        %v545 = vpop.f32.mrf.mxu0
        %v546 = vadd.f32 %v343, %v545
        %547 = vdwg.mxu0
        %v548 = vpack.c.bf16 %v544, %v544
        %v549 = vpack.c.bf16 %v546, %v546
        %v552 = vcombine.low %v548, %v549
        %v554 = vunpack.c.l.s4 1966171168
        %v555 = vunpack.c.0.s8 %v554
        %v556 = vlaneseq
        %v557 = vshrl.u32 %v556, 7
        %v558 = vsub.s32 %v555, %v557
        %v559 = vrot.slane %v552, %v558
        %v561 = vunpack.c.l.s4 1966171168
        %v562 = vunpack.c.0.s8 %v561
        %v563 = vlaneseq
        %v564 = vshrl.u32 %v563, 7
        %v565 = vsub.s32 %v562, %v564
        %v566 = vrot.slane %v559, %v565
        %568 = vst [vmem:[%s272] sm:$0x3] %v566
        %v569 = vld [vmem:[%s3] sm:$0xff]
        %v570 = vld [vmem:[%s3 + $0x8] sm:$0xff]
        %v571 = vld [vmem:[%s4] sm:$0x1]
        %v573 = vlaneseq
        %v574 = vshrl.u32 %v573, 7
        %v575 = vsub.s32 0, %v574
        %v576 = vrot.slane %v571, %v575
        %578 = vmatprep.subr.mxu0 0.0
        %579 = vmatpush1.msra.mxu0 0.0
        %580 = vmatprep.subr.mxu0 0.0
        %581 = vmatpush1.msra.mxu0 0.0
        %582 = vmatprep.subr.mxu0 0.0
        %583 = vmatpush1.msra.mxu0 0.0
        %584 = vmatprep.subr.mxu0 0.0
        %585 = vmatpush1.msra.mxu0 0.0
        %586 = vmatprep.subr.mxu0 0.0
        %587 = vmatpush1.msra.mxu0 0.0
        %588 = vmatprep.subr.mxu0 0.0
        %589 = vmatpush1.msra.mxu0 0.0
        %590 = vmatprep.subr.mxu0 0.0
        %591 = vmatpush1.msra.mxu0 0.0
        %592 = vmatprep.subr.mxu0 0.0
        %593 = vmatpush1.msra.mxu0 0.0
        %594 = vmatprep.subr.mxu0 0.0
        %595 = vmatpush1.msra.mxu0 0.0
        %596 = vmatprep.subr.mxu0 0.0
        %597 = vmatpush1.msra.mxu0 0.0
        %598 = vmatprep.subr.mxu0 0.0
        %599 = vmatpush1.msra.mxu0 0.0
        %600 = vmatprep.subr.mxu0 0.0
        %601 = vmatpush1.msra.mxu0 0.0
        %602 = vmatprep.subr.mxu0 0.0
        %603 = vmatpush1.msra.mxu0 0.0
        %604 = vmatprep.subr.mxu0 0.0
        %605 = vmatpush1.msra.mxu0 0.0
        %606 = vmatprep.subr.mxu0 0.0
        %607 = vmatpush1.msra.mxu0 %v570
        %608 = vmatprep.subr.mxu0 0.0
        %609 = vmatpush1.msra.mxu0 %v569
        %610 = vmatprep.subr.mxu0 0.0
        %611 = vmatpush2.msra.mxu0 0.0
        %612 = vmatprep.subr.mxu0 0.0
        %613 = vmatpush2.msra.mxu0 0.0
        %614 = vmatprep.subr.mxu0 0.0
        %615 = vmatpush2.msra.mxu0 0.0
        %616 = vmatprep.subr.mxu0 0.0
        %617 = vmatpush2.msra.mxu0 0.0
        %618 = vmatprep.subr.mxu0 0.0
        %619 = vmatpush2.msra.mxu0 0.0
        %620 = vmatprep.subr.mxu0 0.0
        %621 = vmatpush2.msra.mxu0 0.0
        %622 = vmatprep.subr.mxu0 0.0
        %623 = vmatpush2.msra.mxu0 0.0
        %624 = vmatprep.subr.mxu0 0.0
        %625 = vmatpush2.msra.mxu0 0.0
        %626 = vmatprep.subr.mxu0 0.0
        %627 = vmatpush2.msra.mxu0 0.0
        %628 = vmatprep.subr.mxu0 0.0
        %629 = vmatpush2.msra.mxu0 0.0
        %630 = vmatprep.subr.mxu0 0.0
        %631 = vmatpush2.msra.mxu0 0.0
        %632 = vmatprep.subr.mxu0 0.0
        %633 = vmatpush2.msra.mxu0 0.0
        %634 = vmatprep.subr.mxu0 0.0
        %635 = vmatpush2.msra.mxu0 0.0
        %636 = vmatprep.subr.mxu0 0.0
        %637 = vmatpush2.msra.mxu0 0.0
        %638 = vmatprep.subr.mxu0 0.0
        %639 = vmatpush2.msra.mxu0 0.0
        %640 = vmatprep.subr.mxu0 0.0
        %641 = vmatpush2.msra.mxu0 0.0
        %642 = vmatprep.mubr.f32.mxu0 0.0
        %643 = vmatmul.mubr.f32.gmra.mxu0 %v382
        %v644 = vpop.f32.mrf.mxu0
        %v645 = vadd.f32 %v576, %v644
        %v646 = vpop.f32.mrf.mxu0
        %647 = vmatprep.mubr.f32.mxu0 0.0
        %648 = vmatmul.mubr.f32.gmra.mxu0 %v385
        %v649 = vpop.f32.mrf.mxu0
        %v650 = vadd.f32 %v576, %v649
        %v651 = vpop.f32.mrf.mxu0
        %652 = vmatprep.mubr.f32.mxu0 0.0
        %653 = vmatmul.mubr.f32.gmra.mxu0 %v388
        %v654 = vpop.f32.mrf.mxu0
        %v655 = vadd.f32 %v576, %v654
        %v656 = vpop.f32.mrf.mxu0
        %657 = vmatprep.mubr.f32.mxu0 0.0
        %658 = vmatmul.mubr.f32.gmra.mxu0 %v391
        %v659 = vpop.f32.mrf.mxu0
        %v660 = vadd.f32 %v576, %v659
        %v661 = vpop.f32.mrf.mxu0
        %662 = vmatprep.mubr.f32.mxu0 0.0
        %663 = vmatmul.mubr.f32.gmra.mxu0 %v394
        %v664 = vpop.f32.mrf.mxu0
        %v665 = vadd.f32 %v576, %v664
        %v666 = vpop.f32.mrf.mxu0
        %667 = vmatprep.mubr.f32.mxu0 0.0
        %668 = vmatmul.mubr.f32.gmra.mxu0 %v397
        %v669 = vpop.f32.mrf.mxu0
        %v670 = vadd.f32 %v576, %v669
        %v671 = vpop.f32.mrf.mxu0
        %672 = vmatprep.mubr.f32.mxu0 0.0
        %673 = vmatmul.mubr.f32.gmra.mxu0 %v400
        %v674 = vpop.f32.mrf.mxu0
        %v675 = vadd.f32 %v576, %v674
        %v676 = vpop.f32.mrf.mxu0
        %677 = vmatprep.mubr.f32.mxu0 0.0
        %678 = vmatmul.mubr.f32.gmra.mxu0 %v403
        %v679 = vpop.f32.mrf.mxu0
        %v680 = vadd.f32 %v576, %v679
        %v681 = vpop.f32.mrf.mxu0
        %682 = vmatprep.mubr.f32.mxu0 0.0
        %683 = vmatmul.mubr.f32.gmra.mxu0 %v406
        %v684 = vpop.f32.mrf.mxu0
        %v685 = vadd.f32 %v576, %v684
        %v686 = vpop.f32.mrf.mxu0
        %687 = vmatprep.mubr.f32.mxu0 0.0
        %688 = vmatmul.mubr.f32.gmra.mxu0 %v409
        %v689 = vpop.f32.mrf.mxu0
        %v690 = vadd.f32 %v576, %v689
        %v691 = vpop.f32.mrf.mxu0
        %692 = vmatprep.mubr.f32.mxu0 0.0
        %693 = vmatmul.mubr.f32.gmra.mxu0 %v412
        %v694 = vpop.f32.mrf.mxu0
        %v695 = vadd.f32 %v576, %v694
        %v696 = vpop.f32.mrf.mxu0
        %697 = vmatprep.mubr.f32.mxu0 0.0
        %698 = vmatmul.mubr.f32.gmra.mxu0 %v415
        %v699 = vpop.f32.mrf.mxu0
        %v700 = vadd.f32 %v576, %v699
        %v701 = vpop.f32.mrf.mxu0
        %702 = vmatprep.mubr.f32.mxu0 0.0
        %703 = vmatmul.mubr.f32.gmra.mxu0 %v418
        %v704 = vpop.f32.mrf.mxu0
        %v705 = vadd.f32 %v576, %v704
        %v706 = vpop.f32.mrf.mxu0
        %707 = vmatprep.mubr.f32.mxu0 0.0
        %708 = vmatmul.mubr.f32.gmra.mxu0 %v421
        %v709 = vpop.f32.mrf.mxu0
        %v710 = vadd.f32 %v576, %v709
        %v711 = vpop.f32.mrf.mxu0
        %712 = vmatprep.mubr.f32.mxu0 0.0
        %713 = vmatmul.mubr.f32.gmra.mxu0 %v424
        %v714 = vpop.f32.mrf.mxu0
        %v715 = vadd.f32 %v576, %v714
        %v716 = vpop.f32.mrf.mxu0
        %717 = vmatprep.mubr.f32.mxu0 0.0
        %718 = vmatmul.mubr.f32.gmra.mxu0 %v427
        %v719 = vpop.f32.mrf.mxu0
        %v720 = vadd.f32 %v576, %v719
        %v721 = vpop.f32.mrf.mxu0
        %722 = vmatprep.mubr.f32.mxu0 0.0
        %723 = vmatmul.mubr.f32.gmra.mxu0 %v430
        %v724 = vpop.f32.mrf.mxu0
        %v725 = vadd.f32 %v576, %v724
        %v726 = vpop.f32.mrf.mxu0
        %727 = vmatprep.mubr.f32.mxu0 0.0
        %728 = vmatmul.mubr.f32.gmra.mxu0 %v433
        %v729 = vpop.f32.mrf.mxu0
        %v730 = vadd.f32 %v576, %v729
        %v731 = vpop.f32.mrf.mxu0
        %732 = vmatprep.mubr.f32.mxu0 0.0
        %733 = vmatmul.mubr.f32.gmra.mxu0 %v436
        %v734 = vpop.f32.mrf.mxu0
        %v735 = vadd.f32 %v576, %v734
        %v736 = vpop.f32.mrf.mxu0
        %737 = vmatprep.mubr.f32.mxu0 0.0
        %738 = vmatmul.mubr.f32.gmra.mxu0 %v439
        %v739 = vpop.f32.mrf.mxu0
        %v740 = vadd.f32 %v576, %v739
        %v741 = vpop.f32.mrf.mxu0
        %742 = vmatprep.mubr.f32.mxu0 0.0
        %743 = vmatmul.mubr.f32.gmra.mxu0 %v442
        %v744 = vpop.f32.mrf.mxu0
        %v745 = vadd.f32 %v576, %v744
        %v746 = vpop.f32.mrf.mxu0
        %747 = vmatprep.mubr.f32.mxu0 0.0
        %748 = vmatmul.mubr.f32.gmra.mxu0 %v445
        %v749 = vpop.f32.mrf.mxu0
        %v750 = vadd.f32 %v576, %v749
        %v751 = vpop.f32.mrf.mxu0
        %752 = vmatprep.mubr.f32.mxu0 0.0
        %753 = vmatmul.mubr.f32.gmra.mxu0 %v448
        %v754 = vpop.f32.mrf.mxu0
        %v755 = vadd.f32 %v576, %v754
        %v756 = vpop.f32.mrf.mxu0
        %757 = vmatprep.mubr.f32.mxu0 0.0
        %758 = vmatmul.mubr.f32.gmra.mxu0 %v451
        %v759 = vpop.f32.mrf.mxu0
        %v760 = vadd.f32 %v576, %v759
        %v761 = vpop.f32.mrf.mxu0
        %762 = vmatprep.mubr.f32.mxu0 0.0
        %763 = vmatmul.mubr.f32.gmra.mxu0 %v454
        %v764 = vpop.f32.mrf.mxu0
        %v765 = vadd.f32 %v576, %v764
        %v766 = vpop.f32.mrf.mxu0
        %767 = vmatprep.mubr.f32.mxu0 0.0
        %768 = vmatmul.mubr.f32.gmra.mxu0 %v457
        %v769 = vpop.f32.mrf.mxu0
        %v770 = vadd.f32 %v576, %v769
        %v771 = vpop.f32.mrf.mxu0
        %772 = vmatprep.mubr.f32.mxu0 0.0
        %773 = vmatmul.mubr.f32.gmra.mxu0 %v460
        %v774 = vpop.f32.mrf.mxu0
        %v775 = vadd.f32 %v576, %v774
        %v776 = vpop.f32.mrf.mxu0
        %777 = vmatprep.mubr.f32.mxu0 0.0
        %778 = vmatmul.mubr.f32.gmra.mxu0 %v463
        %v779 = vpop.f32.mrf.mxu0
        %v780 = vadd.f32 %v576, %v779
        %v781 = vpop.f32.mrf.mxu0
        %782 = vmatprep.mubr.f32.mxu0 0.0
        %783 = vmatmul.mubr.f32.gmra.mxu0 %v466
        %v784 = vpop.f32.mrf.mxu0
        %v785 = vadd.f32 %v576, %v784
        %v786 = vpop.f32.mrf.mxu0
        %787 = vmatprep.mubr.f32.mxu0 0.0
        %788 = vmatmul.mubr.f32.gmra.mxu0 %v469
        %v789 = vpop.f32.mrf.mxu0
        %v790 = vadd.f32 %v576, %v789
        %v791 = vpop.f32.mrf.mxu0
        %792 = vmatprep.mubr.f32.mxu0 0.0
        %793 = vmatmul.mubr.f32.gmra.mxu0 %v472
        %v794 = vpop.f32.mrf.mxu0
        %v795 = vadd.f32 %v576, %v794
        %v796 = vpop.f32.mrf.mxu0
        %797 = vmatprep.mubr.f32.mxu0 0.0
        %798 = vmatmul.mubr.f32.gmra.mxu0 %v475
        %v799 = vpop.f32.mrf.mxu0
        %v800 = vadd.f32 %v576, %v799
        %v801 = vpop.f32.mrf.mxu0
        %802 = vdwg.mxu0
        %v803 = vpack.c.bf16 %v650, %v645
        %v804 = vpack.c.bf16 %v660, %v655
        %v805 = vpack.c.bf16 %v670, %v665
        %v806 = vpack.c.bf16 %v680, %v675
        %v807 = vpack.c.bf16 %v690, %v685
        %v808 = vpack.c.bf16 %v700, %v695
        %v809 = vpack.c.bf16 %v710, %v705
        %v810 = vpack.c.bf16 %v720, %v715
        %v811 = vpack.c.bf16 %v730, %v725
        %v812 = vpack.c.bf16 %v740, %v735
        %v813 = vpack.c.bf16 %v750, %v745
        %v814 = vpack.c.bf16 %v760, %v755
        %v815 = vpack.c.bf16 %v770, %v765
        %v816 = vpack.c.bf16 %v780, %v775
        %v817 = vpack.c.bf16 %v790, %v785
        %v818 = vpack.c.bf16 %v800, %v795
        %v835 = vunpack.c.l.b16 %v803
        %v836 = vunpack.c.h.b16 %v803
        %v837 = vunpack.c.l.b16 %v804
        %v838 = vunpack.c.h.b16 %v804
        %v839 = vunpack.c.l.b16 %v805
        %v840 = vunpack.c.h.b16 %v805
        %v841 = vunpack.c.l.b16 %v806
        %v842 = vunpack.c.h.b16 %v806
        %v843 = vunpack.c.l.b16 %v807
        %v844 = vunpack.c.h.b16 %v807
        %v845 = vunpack.c.l.b16 %v808
        %v846 = vunpack.c.h.b16 %v808
        %v847 = vunpack.c.l.b16 %v809
        %v848 = vunpack.c.h.b16 %v809
        %v849 = vunpack.c.l.b16 %v810
        %v850 = vunpack.c.h.b16 %v810
        %v851 = vunpack.c.l.b16 %v811
        %v852 = vunpack.c.h.b16 %v811
        %v853 = vunpack.c.l.b16 %v812
        %v854 = vunpack.c.h.b16 %v812
        %v855 = vunpack.c.l.b16 %v813
        %v856 = vunpack.c.h.b16 %v813
        %v857 = vunpack.c.l.b16 %v814
        %v858 = vunpack.c.h.b16 %v814
        %v859 = vunpack.c.l.b16 %v815
        %v860 = vunpack.c.h.b16 %v815
        %v861 = vunpack.c.l.b16 %v816
        %v862 = vunpack.c.h.b16 %v816
        %v863 = vunpack.c.l.b16 %v817
        %v864 = vunpack.c.h.b16 %v817
        %v865 = vunpack.c.l.b16 %v818
        %v866 = vunpack.c.h.b16 %v818
        %v867 = vpack.c.b16 %v835, %v835
        %v868 = vpack.c.b16 %v836, %v836
        %v869 = vpack.c.b16 %v837, %v837
        %v870 = vpack.c.b16 %v838, %v838
        %v871 = vpack.c.b16 %v839, %v839
        %v872 = vpack.c.b16 %v840, %v840
        %v873 = vpack.c.b16 %v841, %v841
        %v874 = vpack.c.b16 %v842, %v842
        %v875 = vpack.c.b16 %v843, %v843
        %v876 = vpack.c.b16 %v844, %v844
        %v877 = vpack.c.b16 %v845, %v845
        %v878 = vpack.c.b16 %v846, %v846
        %v879 = vpack.c.b16 %v847, %v847
        %v880 = vpack.c.b16 %v848, %v848
        %v881 = vpack.c.b16 %v849, %v849
        %v882 = vpack.c.b16 %v850, %v850
        %v883 = vpack.c.b16 %v851, %v851
        %v884 = vpack.c.b16 %v852, %v852
        %v885 = vpack.c.b16 %v853, %v853
        %v886 = vpack.c.b16 %v854, %v854
        %v887 = vpack.c.b16 %v855, %v855
        %v888 = vpack.c.b16 %v856, %v856
        %v889 = vpack.c.b16 %v857, %v857
        %v890 = vpack.c.b16 %v858, %v858
        %v891 = vpack.c.b16 %v859, %v859
        %v892 = vpack.c.b16 %v860, %v860
        %v893 = vpack.c.b16 %v861, %v861
        %v894 = vpack.c.b16 %v862, %v862
        %v895 = vpack.c.b16 %v863, %v863
        %v896 = vpack.c.b16 %v864, %v864
        %v897 = vpack.c.b16 %v865, %v865
        %v898 = vpack.c.b16 %v866, %v866
        %vm931 = vcmask 125952
        %932 = vst.msk [vmem:[%s303] sm:$0xf] %vm931, %v867
        %933 = vst.msk [vmem:[%s303 + $0x4] sm:$0xf] %vm931, %v868
        %934 = vst.msk [vmem:[%s303 + $0x8] sm:$0xf] %vm931, %v869
        %935 = vst.msk [vmem:[%s303 + $0xc] sm:$0xf] %vm931, %v870
        %936 = vst.msk [vmem:[%s303 + $0x10] sm:$0xf] %vm931, %v871
        %937 = vst.msk [vmem:[%s303 + $0x14] sm:$0xf] %vm931, %v872
        %938 = vst.msk [vmem:[%s303 + $0x18] sm:$0xf] %vm931, %v873
        %939 = vst.msk [vmem:[%s303 + $0x1c] sm:$0xf] %vm931, %v874
        %940 = vst.msk [vmem:[%s303 + $0x20] sm:$0xf] %vm931, %v875
        %941 = vst.msk [vmem:[%s303 + $0x24] sm:$0xf] %vm931, %v876
        %942 = vst.msk [vmem:[%s303 + $0x28] sm:$0xf] %vm931, %v877
        %943 = vst.msk [vmem:[%s303 + $0x2c] sm:$0xf] %vm931, %v878
        %944 = vst.msk [vmem:[%s303 + $0x30] sm:$0xf] %vm931, %v879
        %945 = vst.msk [vmem:[%s303 + $0x34] sm:$0xf] %vm931, %v880
        %946 = vst.msk [vmem:[%s303 + $0x38] sm:$0xf] %vm931, %v881
        %947 = vst.msk [vmem:[%s303 + $0x3c] sm:$0xf] %vm931, %v882
        %948 = vst.msk [vmem:[%s303 + $0x40] sm:$0xf] %vm931, %v883
        %949 = vst.msk [vmem:[%s303 + $0x44] sm:$0xf] %vm931, %v884
        %950 = vst.msk [vmem:[%s303 + $0x48] sm:$0xf] %vm931, %v885
        %951 = vst.msk [vmem:[%s303 + $0x4c] sm:$0xf] %vm931, %v886
        %952 = vst.msk [vmem:[%s303 + $0x50] sm:$0xf] %vm931, %v887
        %953 = vst.msk [vmem:[%s303 + $0x54] sm:$0xf] %vm931, %v888
        %954 = vst.msk [vmem:[%s303 + $0x58] sm:$0xf] %vm931, %v889
        %955 = vst.msk [vmem:[%s303 + $0x5c] sm:$0xf] %vm931, %v890
        %956 = vst.msk [vmem:[%s303 + $0x60] sm:$0xf] %vm931, %v891
        %957 = vst.msk [vmem:[%s303 + $0x64] sm:$0xf] %vm931, %v892
        %958 = vst.msk [vmem:[%s303 + $0x68] sm:$0xf] %vm931, %v893
        %959 = vst.msk [vmem:[%s303 + $0x6c] sm:$0xf] %vm931, %v894
        %960 = vst.msk [vmem:[%s303 + $0x70] sm:$0xf] %vm931, %v895
        %961 = vst.msk [vmem:[%s303 + $0x74] sm:$0xf] %vm931, %v896
        %962 = vst.msk [vmem:[%s303 + $0x78] sm:$0xf] %vm931, %v897
        %963 = vst.msk [vmem:[%s303 + $0x7c] sm:$0xf] %vm931, %v898
        %s964 = sand.u32 %s155, 1
        %s965 = scalar_lea.sflag [#allocation3], %s964
        %s966 = sand.u32 %s155, 1
        %s967 = smul.addr %s966, 2
        %s968 = scalar_lea.vmem [#allocation2], %s967
        %s969 = smul.u32 32, %s26
        %p970 = scmp.lt.s32.totalorder %s25, 1
        %s971 = scalar_select %p970, %s25, 1
        %p972 = scmp.lt.s32.totalorder %s969, 31
        %s973 = scalar_select %p972, %s969, 31
        %s974 = smul.addr %s971, 32
        %s975 = sadd.s32 %s973, %s974
        %s976 = smul.addr %s975, 4
        %s977 = scalar_lea.vmem %s6, %s976
        // Predicated region
        $region41: #{tpu_custom_call.1} parent=39 // pred_check
          %p978 = pneg %p165
        $region42: #{tpu_custom_call.1} parent=39 // pred_check_branch
          %980 = sbr.rel (%p978) target = $region44
        $region43: #{tpu_custom_call.1} parent=39 // pred_region
          %s981 = smul.u32 2, %s26
          %s983 = ssub.s32 32, 32
          %984 = vsyncadd %s965, %s983
          %s985 = smul.addr %s25, 2
          %s986 = sadd.s32 %s981, %s985
          %s987 = smul.addr %s986, 16
          %s988 = scalar_lea.hbm %s5, %s987
          %s990 = sshll.u32 %s968, 4
          %s991 = int_to_ptr.vmem [resolvable:$true] %s990
          %993 = dma.vmem_to_hbm [thread:$0]  %s991, 32, %s988, %s965
        $region44: #{tpu_custom_call.1} parent=39 // pred_fallthru
          _
        // Predicated region
        $region45: #{tpu_custom_call.1} parent=39 // pred_check
          %p994 = pneg %p193
        $region46: #{tpu_custom_call.1} parent=39 // pred_check_branch
          %996 = sbr.rel (%p994) target = $region48
        $region47: #{tpu_custom_call.1} parent=39 // pred_region
          %s997 = smul.u32 32, %s26
        $region48: #{tpu_custom_call.1} parent=39 // pred_fallthru
          _
      $region40: #{tpu_custom_call.1} parent=5 // pred_fallthru
        _
      %p998 = scmp.le.s32.totalorder 2, %s16
      // Predicated region
      $region49: #{tpu_custom_call.1} parent=5 // pred_check
        %p999 = pneg %p998
      $region50: #{tpu_custom_call.1} parent=5 // pred_check_branch
        %1001 = sbr.rel (%p999) target = $region52
      $region51: #{tpu_custom_call.1} parent=5 // pred_region
        %s1002 = ssub.s32 %s16, 2
        // Predicated region
        $region53: #{tpu_custom_call.1} parent=51 // pred_check
          %p1003 = pneg %p171
        $region54: #{tpu_custom_call.1} parent=51 // pred_check_branch
          %1005 = sbr.rel (%p1003) target = $region56
        $region55: #{tpu_custom_call.1} parent=51 // pred_region
          %s1006 = sand.u32 %s156, 1
          %s1007 = scalar_lea.sflag [#allocation3], %s1006
          %s1008 = sand.u32 %s156, 1
          %s1009 = smul.addr %s1008, 2
          %s1010 = scalar_lea.vmem [#allocation2], %s1009
          %1011 = dma.done %s1007, 32
        $region56: #{tpu_custom_call.1} parent=51 // pred_fallthru
          _
        // Predicated region
        $region57: #{tpu_custom_call.1} parent=51 // pred_check
          %p1012 = pneg %p199
        $region58: #{tpu_custom_call.1} parent=51 // pred_check_branch
          %1014 = sbr.rel (%p1012) target = $region60
        $region59: #{tpu_custom_call.1} parent=51 // pred_region
          %s1015 = smul.u32 32, %s28
          %p1016 = scmp.lt.s32.totalorder %s27, 1
          %s1017 = scalar_select %p1016, %s27, 1
          %p1018 = scmp.lt.s32.totalorder %s1015, 31
          %s1019 = scalar_select %p1018, %s1015, 31
          %s1020 = smul.addr %s1017, 32
          %s1021 = sadd.s32 %s1019, %s1020
          %s1022 = smul.addr %s1021, 4
          %s1023 = scalar_lea.vmem %s6, %s1022
        $region60: #{tpu_custom_call.1} parent=51 // pred_fallthru
          _
      $region52: #{tpu_custom_call.1} parent=5 // pred_fallthru
        _
    $region6: #{tpu_custom_call.1} parent=1 // loop_footer
      %s20 = sadd.s32 1, %s16
    $region7: #{tpu_custom_call.1} parent=1 // loop_footer_branch
      %15 = sbr.rel target = $region3
    $region8: #{tpu_custom_call.1} parent=1 // loop_exit
      _
    %1024 = vsyncpa [#allocation3], 1
    %s1025 = scalar_lea.sflag [#allocation3], 1
    %1026 = vsyncpa %s1025, 1

</llo_original>
